<compile_context>
chip_gen: v7x
topology: tpu7x:2x2x1
jax: 0.10.0
libtpu: 0.0.40
codegen_flags: <defaults>
</compile_context>

<pallas_src>
import jax
import jax.numpy as jnp
from jax.experimental import pallas as pl
from jax.experimental.pallas import tpu as pltpu

EPS = 1e-5
LANE = 128   # padded hidden / output width (assumes 5*D <= 128 and H <= 128)


# ----------------------------------------------------------------------------
# Kernel
# ----------------------------------------------------------------------------
def _resblock(h, wA, bA, wB, bB):
    # x + ReLU(Linear(ReLU(Linear(x))));  h is f32, weights bf16, f32 accumulate.
    t = jnp.maximum(
        jnp.dot(h.astype(jnp.bfloat16), wA, preferred_element_type=jnp.float32) + bA, 0.0)
    t = jnp.maximum(
        jnp.dot(t.astype(jnp.bfloat16), wB, preferred_element_type=jnp.float32) + bB, 0.0)
    return h + t


def _bn_stats(h):
    # Single-pass batch statistics (biased variance, PyTorch training-mode BN).
    mean = jnp.mean(h, axis=0, keepdims=True)
    msq = jnp.mean(h * h, axis=0, keepdims=True)
    var = jnp.maximum(msq - mean * mean, 0.0)
    return mean, var


def resnet_marginal_kernel(x_ref, w1_ref, wsq_ref, vec_ref, out_ref):
    # Packed row-vectors: [b1, b2, b3, g1, be1, b4, b5, b6_folded]
    b1 = vec_ref[0:1, :]
    b2 = vec_ref[1:2, :]
    b3 = vec_ref[2:3, :]
    g1 = vec_ref[3:4, :]
    be1 = vec_ref[4:5, :]
    b4 = vec_ref[5:6, :]
    b5 = vec_ref[6:7, :]
    b6 = vec_ref[7:8, :]

    x = x_ref[...].astype(jnp.bfloat16)

    # ---- nn_common ----
    h = jnp.maximum(
        jnp.dot(x, w1_ref[...], preferred_element_type=jnp.float32) + b1, 0.0)
    h = _resblock(h, wsq_ref[0], b2, wsq_ref[1], b3)
    # BatchNorm1d #1 (training-mode batch stats; affine kept in-kernel because a
    # residual skip path follows).
    mean, var = _bn_stats(h)
    h = (h - mean) * jax.lax.rsqrt(var + EPS) * g1 + be1

    # ---- nn_mean ----
    h = _resblock(h, wsq_ref[2], b4, wsq_ref[3], b5)
    # BatchNorm1d #2: affine folded into the final Linear -> normalize only.
    mean, var = _bn_stats(h)
    h = (h - mean) * jax.lax.rsqrt(var + EPS)

    out_ref[...] = (
        jnp.dot(h.astype(jnp.bfloat16), wsq_ref[4], preferred_element_type=jnp.float32) + b6)


# ----------------------------------------------------------------------------
# Parameter construction / packing
# ----------------------------------------------------------------------------
def make_params(key, D, H):
    """Deterministic synthetic parameters (shapes match the PyTorch module)."""
    dim1 = 5 * D
    ks = jax.random.split(key, 6)

    def lin(k, fan_in, fan_out):
        kw, kb = jax.random.split(k)
        s = 1.0 / jnp.sqrt(fan_in)
        w = jax.random.uniform(kw, (fan_in, fan_out), jnp.float32, -s, s)
        b = jax.random.uniform(kb, (1, fan_out), jnp.float32, -s, s)
        return w, b

    p = {}
    p["w1"], p["b1"] = lin(ks[0], D, dim1)
    p["w2"], p["b2"] = lin(ks[1], dim1, dim1)
    p["w3"], p["b3"] = lin(ks[2], dim1, dim1)
    p["g1"] = jnp.ones((1, dim1), jnp.float32)      # BN1 weight init = 1
    p["be1"] = jnp.zeros((1, dim1), jnp.float32)    # BN1 bias init = 0
    p["w4"], p["b4"] = lin(ks[3], dim1, dim1)
    p["w5"], p["b5"] = lin(ks[4], dim1, dim1)
    p["g2"] = jnp.ones((1, dim1), jnp.float32)
    p["be2"] = jnp.zeros((1, dim1), jnp.float32)
    p["w6"], p["b6"] = lin(ks[5], dim1, H)
    return p


def pack_params(params, D, H):
    """Fold BN#2 affine into the last Linear, zero-pad to 128 lanes, pack & cast."""
    dim1 = 5 * D
    assert dim1 <= LANE and H <= LANE, "packing scheme assumes 5*D <= 128 and H <= 128"

    def pad_cols(v, width):
        return jnp.pad(v, ((0, 0), (0, width - v.shape[1])))

    def pad_mat(w, rows, cols):
        return jnp.pad(w, ((0, rows - w.shape[0]), (0, cols - w.shape[1])))

    # Fold BatchNorm #2 affine into final Linear (done once, in f32, at pack time).
    w6f = params["g2"].reshape(-1, 1) * params["w6"]            # (dim1, H)
    b6f = params["be2"] @ params["w6"] + params["b6"]           # (1, H)

    w1p = pad_mat(params["w1"], D, LANE).astype(jnp.bfloat16)    # (D, 128)
    wsq = jnp.stack([
        pad_mat(params["w2"], LANE, LANE),
        pad_mat(params["w3"], LANE, LANE),
        pad_mat(params["w4"], LANE, LANE),
        pad_mat(params["w5"], LANE, LANE),
        pad_mat(w6f, LANE, LANE),
    ]).astype(jnp.bfloat16)                                      # (5, 128, 128)
    vecs = jnp.concatenate([
        pad_cols(params["b1"], LANE),
        pad_cols(params["b2"], LANE),
        pad_cols(params["b3"], LANE),
        pad_cols(params["g1"], LANE),
        pad_cols(params["be1"], LANE),
        pad_cols(params["b4"], LANE),
        pad_cols(params["b5"], LANE),
        pad_cols(b6f, LANE),
    ], axis=0).astype(jnp.float32)                               # (8, 128)
    return w1p, wsq, vecs


# ----------------------------------------------------------------------------
# Wrapper
# ----------------------------------------------------------------------------
def resnet_marginal_forward(X, indexes, packed, H):
    # `indexes` is unused by the PyTorch forward; kept for API parity.
    del indexes
    B, D = X.shape
    w1p, wsq, vecs = packed

    in_specs = [
        pl.BlockSpec((B, D), lambda i: (0, 0)),              # X
        pl.BlockSpec((D, LANE), lambda i: (0, 0)),            # padded input projection
        pl.BlockSpec((5, LANE, LANE), lambda i: (0, 0, 0)),   # packed square weights
        pl.BlockSpec((8, LANE), lambda i: (0, 0)),            # packed biases / BN vectors
    ]
    out_spec = pl.BlockSpec((B, LANE), lambda i: (0, 0))      # lane-dense output block

    cost = pl.CostEstimate(
        flops=2 * B * D * LANE + 2 * B * LANE * LANE * 5 + 24 * B * LANE,
        transcendentals=2 * LANE,
        bytes_accessed=(X.size * 4 + w1p.size * 2 + wsq.size * 2
                        + vecs.size * 4 + B * LANE * 4),
    )

    out_padded = pl.pallas_call(
        resnet_marginal_kernel,
        out_shape=jax.ShapeDtypeStruct((B, LANE), jnp.float32),
        grid_spec=pltpu.PrefetchScalarGridSpec(
            num_scalar_prefetch=0,
            grid=(1,),
            in_specs=in_specs,
            out_specs=out_spec,
        ),
        compiler_params=pltpu.CompilerParams(
            dimension_semantics=("arbitrary",)),
        cost_estimate=cost,
    )(X, w1p, wsq, vecs)

    return out_padded[:, :H]


# ----------------------------------------------------------------------------
# References (for correctness checking)
# ----------------------------------------------------------------------------
def reference_packed(X, packed, H):
    """Mirrors the kernel math (same packed params, bf16 matmuls, f32 accumulate)."""
    w1p, wsq, vecs = packed
    bf = jnp.bfloat16
    b1, b2, b3, g1, be1, b4, b5, b6 = [vecs[i:i + 1] for i in range(8)]

    def rb(h, wA, bA, wB, bB):
        t = jnp.maximum(jnp.dot(h.astype(bf), wA, preferred_element_type=jnp.float32) + bA, 0.0)
        t = jnp.maximum(jnp.dot(t.astype(bf), wB, preferred_element_type=jnp.float32) + bB, 0.0)
        return h + t

    def stats(h):
        m = jnp.mean(h, 0, keepdims=True)
        v = jnp.maximum(jnp.mean(h * h, 0, keepdims=True) - m * m, 0.0)
        return m, v

    h = jnp.maximum(jnp.dot(X.astype(bf), w1p, preferred_element_type=jnp.float32) + b1, 0.0)
    h = rb(h, wsq[0], b2, wsq[1], b3)
    m, v = stats(h)
    h = (h - m) * jax.lax.rsqrt(v + EPS) * g1 + be1
    h = rb(h, wsq[2], b4, wsq[3], b5)
    m, v = stats(h)
    h = (h - m) * jax.lax.rsqrt(v + EPS)
    out = jnp.dot(h.astype(bf), wsq[4], preferred_element_type=jnp.float32) + b6
    return out[:, :H]


def reference_f32(X, params):
    """Original (unfolded, unpadded) f32 module semantics — loose sanity check."""
    def rb(h, wA, bA, wB, bB):
        t = jnp.maximum(h @ wA + bA, 0.0)
        t = jnp.maximum(t @ wB + bB, 0.0)
        return h + t

    def bn(h, g, b):
        m = jnp.mean(h, 0, keepdims=True)
        v = jnp.mean((h - m) ** 2, 0, keepdims=True)
        return (h - m) * jax.lax.rsqrt(v + EPS) * g + b

    h = jnp.maximum(X @ params["w1"] + params["b1"], 0.0)
    h = rb(h, params["w2"], params["b2"], params["w3"], params["b3"])
    h = bn(h, params["g1"], params["be1"])
    h = rb(h, params["w4"], params["b4"], params["w5"], params["b5"])
    h = bn(h, params["g2"], params["be2"])
    return h @ params["w6"] + params["b6"]


if __name__ == "__main__":
    # Small, forward-consistent shapes: dataset size N (unused by compute),
    # feature dim D, latent dim H, batch B (multiple of 8 for exact sublane fit).
    N, D, H, B = 100, 16, 8, 8

    key = jax.random.PRNGKey(0)
    k_x, k_p = jax.random.split(key)
    X = jax.random.normal(k_x, (B, D), jnp.float32)
    indexes = jnp.arange(B, dtype=jnp.int32)   # unused by forward (API parity)
    params = make_params(k_p, D, H)
    packed = pack_params(params, D, H)

    out = resnet_marginal_forward(X, indexes, packed, H)
    out = jax.block_until_ready(out)
    assert out.shape == (B, H)

    # Strict check vs a pure-JAX mirror of the kernel math (same bf16 precision).
    ref_bf = reference_packed(X, packed, H)
    assert jnp.allclose(out, ref_bf, atol=2e-3, rtol=2e-3), "mismatch vs packed bf16 reference"

    # Loose sanity check vs the original f32 module semantics (bf16 roundoff expected).
    ref32 = reference_f32(X, params)
    rel_err = jnp.linalg.norm(out - ref32) / jnp.linalg.norm(ref32)
    assert rel_err < 5e-2, f"relative error vs f32 reference too large: {rel_err}"

    print("KERNEL_OK")
</pallas_src>

<mosaic_0001>
module attributes {stable_mosaic.version = 11 : i64} {
  func.func @resnet_marginal_kernel(%arg0: i32, %arg1: memref<8x16xf32, #tpu.memory_space<vmem>>, %arg2: memref<16x128xbf16, #tpu.memory_space<vmem>>, %arg3: memref<5x128x128xbf16, #tpu.memory_space<vmem>>, %arg4: memref<8x128xf32, #tpu.memory_space<vmem>>, %arg5: memref<8x128xf32, #tpu.memory_space<vmem>>) attributes {dimension_semantics = [#tpu.dimension_semantics<arbitrary>], iteration_bounds = array<i64: 1>, scalar_prefetch = 0 : i64, scratch_operands = 0 : i64, tpu.core_type = #tpu.core_type<tc>, window_params = [{pipeline_mode = #tpu.pipeline_mode<synchronous>, transform_indices = @transform_0, window_bounds = array<i64: 8, 16>}, {pipeline_mode = #tpu.pipeline_mode<synchronous>, transform_indices = @transform_1, window_bounds = array<i64: 16, 128>}, {pipeline_mode = #tpu.pipeline_mode<synchronous>, transform_indices = @transform_2, window_bounds = array<i64: 5, 128, 128>}, {pipeline_mode = #tpu.pipeline_mode<synchronous>, transform_indices = @transform_3, window_bounds = array<i64: 8, 128>}, {pipeline_mode = #tpu.pipeline_mode<synchronous>, transform_indices = @transform_4, window_bounds = array<i64: 8, 128>}]} {
    %c0 = arith.constant 0 : index
    %c0_0 = arith.constant 0 : index
    %0 = vector.load %arg4[%c0, %c0_0] : memref<8x128xf32, #tpu.memory_space<vmem>>, vector<1x128xf32>
    %c1 = arith.constant 1 : index
    %c0_1 = arith.constant 0 : index
    %1 = vector.load %arg4[%c1, %c0_1] : memref<8x128xf32, #tpu.memory_space<vmem>>, vector<1x128xf32>
    %c2 = arith.constant 2 : index
    %c0_2 = arith.constant 0 : index
    %2 = vector.load %arg4[%c2, %c0_2] : memref<8x128xf32, #tpu.memory_space<vmem>>, vector<1x128xf32>
    %c3 = arith.constant 3 : index
    %c0_3 = arith.constant 0 : index
    %3 = vector.load %arg4[%c3, %c0_3] : memref<8x128xf32, #tpu.memory_space<vmem>>, vector<1x128xf32>
    %c4 = arith.constant 4 : index
    %c0_4 = arith.constant 0 : index
    %4 = vector.load %arg4[%c4, %c0_4] : memref<8x128xf32, #tpu.memory_space<vmem>>, vector<1x128xf32>
    %c5 = arith.constant 5 : index
    %c0_5 = arith.constant 0 : index
    %5 = vector.load %arg4[%c5, %c0_5] : memref<8x128xf32, #tpu.memory_space<vmem>>, vector<1x128xf32>
    %c6 = arith.constant 6 : index
    %c0_6 = arith.constant 0 : index
    %6 = vector.load %arg4[%c6, %c0_6] : memref<8x128xf32, #tpu.memory_space<vmem>>, vector<1x128xf32>
    %c7 = arith.constant 7 : index
    %c0_7 = arith.constant 0 : index
    %7 = vector.load %arg4[%c7, %c0_7] : memref<8x128xf32, #tpu.memory_space<vmem>>, vector<1x128xf32>
    %c0_8 = arith.constant 0 : index
    %c0_9 = arith.constant 0 : index
    %8 = vector.load %arg1[%c0_8, %c0_9] : memref<8x16xf32, #tpu.memory_space<vmem>>, vector<8x16xf32>
    %9 = arith.truncf %8 : vector<8x16xf32> to vector<8x16xbf16>
    %c0_10 = arith.constant 0 : index
    %c0_11 = arith.constant 0 : index
    %10 = vector.load %arg2[%c0_10, %c0_11] : memref<16x128xbf16, #tpu.memory_space<vmem>>, vector<16x128xbf16>
    %cst = arith.constant dense<0.000000e+00> : vector<8x128xf32>
    %11 = tpu.matmul %9, %10, %cst {dimension_numbers = #tpu.dot_dimension_numbers<[1], [0], [0], [1], [0, 0, 1, 1], [], []>} : vector<8x16xbf16>, vector<16x128xbf16>, vector<8x128xf32> -> vector<8x128xf32>
    %12 = vector.broadcast %0 : vector<1x128xf32> to vector<8x128xf32>
    %13 = arith.addf %11, %12 : vector<8x128xf32>
    %cst_12 = arith.constant 0.000000e+00 : f32
    %14 = vector.broadcast %cst_12 : f32 to vector<8x128xf32>
    %15 = arith.maximumf %13, %14 : vector<8x128xf32>
    %c0_13 = arith.constant 0 : index
    %c0_14 = arith.constant 0 : index
    %c0_15 = arith.constant 0 : index
    %16 = vector.load %arg3[%c0_13, %c0_14, %c0_15] : memref<5x128x128xbf16, #tpu.memory_space<vmem>>, vector<1x128x128xbf16>
    %17 = vector.shape_cast %16 : vector<1x128x128xbf16> to vector<128x128xbf16>
    %c1_16 = arith.constant 1 : index
    %c0_17 = arith.constant 0 : index
    %c0_18 = arith.constant 0 : index
    %18 = vector.load %arg3[%c1_16, %c0_17, %c0_18] : memref<5x128x128xbf16, #tpu.memory_space<vmem>>, vector<1x128x128xbf16>
    %19 = vector.shape_cast %18 : vector<1x128x128xbf16> to vector<128x128xbf16>
    %20 = arith.truncf %15 : vector<8x128xf32> to vector<8x128xbf16>
    %cst_19 = arith.constant dense<0.000000e+00> : vector<8x128xf32>
    %21 = tpu.matmul %20, %17, %cst_19 {dimension_numbers = #tpu.dot_dimension_numbers<[1], [0], [0], [1], [0, 0, 1, 1], [], []>} : vector<8x128xbf16>, vector<128x128xbf16>, vector<8x128xf32> -> vector<8x128xf32>
    %22 = vector.broadcast %1 : vector<1x128xf32> to vector<8x128xf32>
    %23 = arith.addf %21, %22 : vector<8x128xf32>
    %cst_20 = arith.constant 0.000000e+00 : f32
    %24 = vector.broadcast %cst_20 : f32 to vector<8x128xf32>
    %25 = arith.maximumf %23, %24 : vector<8x128xf32>
    %26 = arith.truncf %25 : vector<8x128xf32> to vector<8x128xbf16>
    %cst_21 = arith.constant dense<0.000000e+00> : vector<8x128xf32>
    %27 = tpu.matmul %26, %19, %cst_21 {dimension_numbers = #tpu.dot_dimension_numbers<[1], [0], [0], [1], [0, 0, 1, 1], [], []>} : vector<8x128xbf16>, vector<128x128xbf16>, vector<8x128xf32> -> vector<8x128xf32>
    %28 = vector.broadcast %2 : vector<1x128xf32> to vector<8x128xf32>
    %29 = arith.addf %27, %28 : vector<8x128xf32>
    %cst_22 = arith.constant 0.000000e+00 : f32
    %30 = vector.broadcast %cst_22 : f32 to vector<8x128xf32>
    %31 = arith.maximumf %29, %30 : vector<8x128xf32>
    %32 = arith.addf %15, %31 : vector<8x128xf32>
    %cst_23 = arith.constant dense<0.000000e+00> : vector<128xf32>
    %33 = vector.multi_reduction <add>, %32, %cst_23 [0] : vector<8x128xf32> to vector<128xf32>
    %34 = vector.shape_cast %33 : vector<128xf32> to vector<1x128xf32>
    %cst_24 = arith.constant 8.000000e+00 : f32
    %35 = vector.broadcast %cst_24 : f32 to vector<1x128xf32>
    %36 = arith.divf %34, %35 : vector<1x128xf32>
    %37 = arith.mulf %32, %32 : vector<8x128xf32>
    %cst_25 = arith.constant dense<0.000000e+00> : vector<128xf32>
    %38 = vector.multi_reduction <add>, %37, %cst_25 [0] : vector<8x128xf32> to vector<128xf32>
    %39 = vector.shape_cast %38 : vector<128xf32> to vector<1x128xf32>
    %cst_26 = arith.constant 8.000000e+00 : f32
    %40 = vector.broadcast %cst_26 : f32 to vector<1x128xf32>
    %41 = arith.divf %39, %40 : vector<1x128xf32>
    %42 = arith.mulf %36, %36 : vector<1x128xf32>
    %43 = arith.subf %41, %42 : vector<1x128xf32>
    %cst_27 = arith.constant 0.000000e+00 : f32
    %44 = vector.broadcast %cst_27 : f32 to vector<1x128xf32>
    %45 = arith.maximumf %43, %44 : vector<1x128xf32>
    %46 = vector.broadcast %36 : vector<1x128xf32> to vector<8x128xf32>
    %47 = arith.subf %32, %46 : vector<8x128xf32>
    %cst_28 = arith.constant 9.99999974E-6 : f32
    %48 = vector.broadcast %cst_28 : f32 to vector<1x128xf32>
    %49 = arith.addf %45, %48 : vector<1x128xf32>
    %50 = math.rsqrt %49 : vector<1x128xf32>
    %51 = vector.broadcast %50 : vector<1x128xf32> to vector<8x128xf32>
    %52 = arith.mulf %47, %51 : vector<8x128xf32>
    %53 = vector.broadcast %3 : vector<1x128xf32> to vector<8x128xf32>
    %54 = arith.mulf %52, %53 : vector<8x128xf32>
    %55 = vector.broadcast %4 : vector<1x128xf32> to vector<8x128xf32>
    %56 = arith.addf %54, %55 : vector<8x128xf32>
    %c2_29 = arith.constant 2 : index
    %c0_30 = arith.constant 0 : index
    %c0_31 = arith.constant 0 : index
    %57 = vector.load %arg3[%c2_29, %c0_30, %c0_31] : memref<5x128x128xbf16, #tpu.memory_space<vmem>>, vector<1x128x128xbf16>
    %58 = vector.shape_cast %57 : vector<1x128x128xbf16> to vector<128x128xbf16>
    %c3_32 = arith.constant 3 : index
    %c0_33 = arith.constant 0 : index
    %c0_34 = arith.constant 0 : index
    %59 = vector.load %arg3[%c3_32, %c0_33, %c0_34] : memref<5x128x128xbf16, #tpu.memory_space<vmem>>, vector<1x128x128xbf16>
    %60 = vector.shape_cast %59 : vector<1x128x128xbf16> to vector<128x128xbf16>
    %61 = arith.truncf %56 : vector<8x128xf32> to vector<8x128xbf16>
    %cst_35 = arith.constant dense<0.000000e+00> : vector<8x128xf32>
    %62 = tpu.matmul %61, %58, %cst_35 {dimension_numbers = #tpu.dot_dimension_numbers<[1], [0], [0], [1], [0, 0, 1, 1], [], []>} : vector<8x128xbf16>, vector<128x128xbf16>, vector<8x128xf32> -> vector<8x128xf32>
    %63 = vector.broadcast %5 : vector<1x128xf32> to vector<8x128xf32>
    %64 = arith.addf %62, %63 : vector<8x128xf32>
    %cst_36 = arith.constant 0.000000e+00 : f32
    %65 = vector.broadcast %cst_36 : f32 to vector<8x128xf32>
    %66 = arith.maximumf %64, %65 : vector<8x128xf32>
    %67 = arith.truncf %66 : vector<8x128xf32> to vector<8x128xbf16>
    %cst_37 = arith.constant dense<0.000000e+00> : vector<8x128xf32>
    %68 = tpu.matmul %67, %60, %cst_37 {dimension_numbers = #tpu.dot_dimension_numbers<[1], [0], [0], [1], [0, 0, 1, 1], [], []>} : vector<8x128xbf16>, vector<128x128xbf16>, vector<8x128xf32> -> vector<8x128xf32>
    %69 = vector.broadcast %6 : vector<1x128xf32> to vector<8x128xf32>
    %70 = arith.addf %68, %69 : vector<8x128xf32>
    %cst_38 = arith.constant 0.000000e+00 : f32
    %71 = vector.broadcast %cst_38 : f32 to vector<8x128xf32>
    %72 = arith.maximumf %70, %71 : vector<8x128xf32>
    %73 = arith.addf %56, %72 : vector<8x128xf32>
    %cst_39 = arith.constant dense<0.000000e+00> : vector<128xf32>
    %74 = vector.multi_reduction <add>, %73, %cst_39 [0] : vector<8x128xf32> to vector<128xf32>
    %75 = vector.shape_cast %74 : vector<128xf32> to vector<1x128xf32>
    %cst_40 = arith.constant 8.000000e+00 : f32
    %76 = vector.broadcast %cst_40 : f32 to vector<1x128xf32>
    %77 = arith.divf %75, %76 : vector<1x128xf32>
    %78 = arith.mulf %73, %73 : vector<8x128xf32>
    %cst_41 = arith.constant dense<0.000000e+00> : vector<128xf32>
    %79 = vector.multi_reduction <add>, %78, %cst_41 [0] : vector<8x128xf32> to vector<128xf32>
    %80 = vector.shape_cast %79 : vector<128xf32> to vector<1x128xf32>
    %cst_42 = arith.constant 8.000000e+00 : f32
    %81 = vector.broadcast %cst_42 : f32 to vector<1x128xf32>
    %82 = arith.divf %80, %81 : vector<1x128xf32>
    %83 = arith.mulf %77, %77 : vector<1x128xf32>
    %84 = arith.subf %82, %83 : vector<1x128xf32>
    %cst_43 = arith.constant 0.000000e+00 : f32
    %85 = vector.broadcast %cst_43 : f32 to vector<1x128xf32>
    %86 = arith.maximumf %84, %85 : vector<1x128xf32>
    %87 = vector.broadcast %77 : vector<1x128xf32> to vector<8x128xf32>
    %88 = arith.subf %73, %87 : vector<8x128xf32>
    %cst_44 = arith.constant 9.99999974E-6 : f32
    %89 = vector.broadcast %cst_44 : f32 to vector<1x128xf32>
    %90 = arith.addf %86, %89 : vector<1x128xf32>
    %91 = math.rsqrt %90 : vector<1x128xf32>
    %92 = vector.broadcast %91 : vector<1x128xf32> to vector<8x128xf32>
    %93 = arith.mulf %88, %92 : vector<8x128xf32>
    %94 = arith.truncf %93 : vector<8x128xf32> to vector<8x128xbf16>
    %c4_45 = arith.constant 4 : index
    %c0_46 = arith.constant 0 : index
    %c0_47 = arith.constant 0 : index
    %95 = vector.load %arg3[%c4_45, %c0_46, %c0_47] : memref<5x128x128xbf16, #tpu.memory_space<vmem>>, vector<1x128x128xbf16>
    %96 = vector.shape_cast %95 : vector<1x128x128xbf16> to vector<128x128xbf16>
    %cst_48 = arith.constant dense<0.000000e+00> : vector<8x128xf32>
    %97 = tpu.matmul %94, %96, %cst_48 {dimension_numbers = #tpu.dot_dimension_numbers<[1], [0], [0], [1], [0, 0, 1, 1], [], []>} : vector<8x128xbf16>, vector<128x128xbf16>, vector<8x128xf32> -> vector<8x128xf32>
    %98 = vector.broadcast %7 : vector<1x128xf32> to vector<8x128xf32>
    %99 = arith.addf %97, %98 : vector<8x128xf32>
    %c0_49 = arith.constant 0 : index
    %c0_50 = arith.constant 0 : index
    %100 = vector.load %arg5[%c0_49, %c0_50] : memref<8x128xf32, #tpu.memory_space<vmem>>, vector<8x128xf32>
    tpu.vector_store %arg5[%c0_49, %c0_50], %99 {strides = array<i32>} : memref<8x128xf32, #tpu.memory_space<vmem>>, vector<8x128xf32>,
    return
  }
  func.func @transform_0(%arg0: i32) -> (i32, i32) {
    %c0_i32 = arith.constant 0 : i32
    %c0_i32_0 = arith.constant 0 : i32
    %c0_i32_1 = arith.constant 0 : i32
    return %c0_i32, %c0_i32_0 : i32, i32
  }
  func.func @transform_1(%arg0: i32) -> (i32, i32) {
    %c0_i32 = arith.constant 0 : i32
    %c0_i32_0 = arith.constant 0 : i32
    %c0_i32_1 = arith.constant 0 : i32
    return %c0_i32, %c0_i32_0 : i32, i32
  }
  func.func @transform_2(%arg0: i32) -> (i32, i32, i32) {
    %c0_i32 = arith.constant 0 : i32
    %c0_i32_0 = arith.constant 0 : i32
    %c0_i32_1 = arith.constant 0 : i32
    %c0_i32_2 = arith.constant 0 : i32
    return %c0_i32, %c0_i32_0, %c0_i32_1 : i32, i32, i32
  }
  func.func @transform_3(%arg0: i32) -> (i32, i32) {
    %c0_i32 = arith.constant 0 : i32
    %c0_i32_0 = arith.constant 0 : i32
    %c0_i32_1 = arith.constant 0 : i32
    return %c0_i32, %c0_i32_0 : i32, i32
  }
  func.func @transform_4(%arg0: i32) -> (i32, i32) {
    %c0_i32 = arith.constant 0 : i32
    %c0_i32_0 = arith.constant 0 : i32
    %c0_i32_1 = arith.constant 0 : i32
    return %c0_i32, %c0_i32_0 : i32, i32
  }
}

</mosaic_0001>

<llo_original>
// kernel: tpu_custom_call.1
$region0: #{tpu_custom_call.1}
  #allocation0 [shape = 'u32[]', space=smem, size = 0x4, offset = 0x4, fixed_abs, tag = 'smem constant byte address 0x4 - core index']
  #allocation1 [shape = 'u32[144,128]{1,0:T(1,128)}', space=vmem, size = 0x12000, scoped, tag = 'internal scratch']
  %s0 = inlined_call_operand.hbm [shape: f32[8,16], index: 0, kind: input, shape index: {}]
  %s1 = inlined_call_operand.hbm [shape: bf16[16,128], index: 1, kind: input, shape index: {}]
  %s2 = inlined_call_operand.hbm [shape: bf16[5,128,128], index: 2, kind: input, shape index: {}]
  %s3 = inlined_call_operand.vmem [shape: f32[8,128], index: 3, kind: input, shape index: {}]
  %s4 = inlined_call_operand.hbm [shape: f32[8,128], index: 4, kind: output, shape index: {}]
  %s5 = sld [smem:[#allocation0]]
  $region38: #{tpu_custom_call.1} parent=0
    _
  %s7 = ssub.s32 1, %s5
  %s8 = scalar_select 0, %s7, %s5
  $region1: #{tpu_custom_call.1} parent=0
    #allocation2 [shape = 'u8[4096]{0}', space=vmem, size = 0x1000, scoped, tag = 'input window, operand 0, single buffered']
    #allocation3 [shape = 's32[1]{0}', space=sflag, size = 0x4, scoped, tag = 'scoped memory for tpu_custom_call.1']
    #allocation4 [shape = 's32[1]{0}', space=sflag, size = 0x4, scoped, tag = 'scoped memory for tpu_custom_call.1']
    #allocation5 [shape = 'u8[4096]{0}', space=vmem, size = 0x1000, scoped, tag = 'input window, operand 1, single buffered']
    #allocation6 [shape = 's32[1]{0}', space=sflag, size = 0x4, scoped, tag = 'scoped memory for tpu_custom_call.1']
    #allocation7 [shape = 'u8[163840]{0}', space=vmem, size = 0x28000, scoped, tag = 'input window, operand 2, single buffered']
    #allocation8 [shape = 'u8[4096]{0}', space=vmem, size = 0x1000, scoped, tag = 'output window, operand 0, single buffered']
    %9 = vsyncpa [#allocation3], 0
    %10 = vsyncpa [#allocation6], 0
    %11 = vsyncpa [#allocation4], 0
    // Predicated region
    $region2: #{tpu_custom_call.1} parent=1 // pred_check
      _
    $region3: #{tpu_custom_call.1} parent=1 // pred_check_branch
      %13 = sbr.rel (0) target = $region5
    $region4: #{tpu_custom_call.1} parent=1 // pred_region
      %s15 = ssub.s32 128, 128
      %16 = vsyncadd [#allocation3], %s15
      %s18 = sshll.u32 [#allocation2], 4
      %s19 = int_to_ptr.vmem [resolvable:$true] %s18
      %21 = dma.hbm_to_vmem [thread:$0]  %s0, 128, %s19, [#allocation3]
    $region5: #{tpu_custom_call.1} parent=1 // pred_fallthru
      _
    // Predicated region
    $region6: #{tpu_custom_call.1} parent=1 // pred_check
      _
    $region7: #{tpu_custom_call.1} parent=1 // pred_check_branch
      %23 = sbr.rel (0) target = $region9
    $region8: #{tpu_custom_call.1} parent=1 // pred_region
      %s25 = ssub.s32 128, 128
      %26 = vsyncadd [#allocation6], %s25
      %s27 = sshll.u32 [#allocation5], 4
      %s28 = int_to_ptr.vmem [resolvable:$true] %s27
      %33 = dma.hbm_to_vmem [thread:$0]  %s1, 128, %s28, [#allocation6], 64, 64, 4
    $region9: #{tpu_custom_call.1} parent=1 // pred_fallthru
      _
    // Predicated region
    $region10: #{tpu_custom_call.1} parent=1 // pred_check
      _
    $region11: #{tpu_custom_call.1} parent=1 // pred_check_branch
      %35 = sbr.rel (0) target = $region13
    $region12: #{tpu_custom_call.1} parent=1 // pred_region
      %s37 = ssub.s32 5120, 5120
      %38 = vsyncadd [#allocation6], %s37
      %s39 = sshll.u32 [#allocation7], 4
      %s40 = int_to_ptr.vmem [resolvable:$true] %s39
      %45 = dma.hbm_to_vmem [thread:$0]  %s2, 5120, %s40, [#allocation6], 64, 64, 4
    $region13: #{tpu_custom_call.1} parent=1 // pred_fallthru
      _
    // Predicated region
    $region14: #{tpu_custom_call.1} parent=1 // pred_check
      _
    $region15: #{tpu_custom_call.1} parent=1 // pred_check_branch
      %47 = sbr.rel (0) target = $region17
    $region16: #{tpu_custom_call.1} parent=1 // pred_region
      _
    $region17: #{tpu_custom_call.1} parent=1 // pred_fallthru
      _
    // Predicated region
    $region18: #{tpu_custom_call.1} parent=1 // pred_check
      _
    $region19: #{tpu_custom_call.1} parent=1 // pred_check_branch
      %49 = sbr.rel (0) target = $region21
    $region20: #{tpu_custom_call.1} parent=1 // pred_region
      %50 = dma.done [#allocation3], 128
    $region21: #{tpu_custom_call.1} parent=1 // pred_fallthru
      _
    // Predicated region
    $region22: #{tpu_custom_call.1} parent=1 // pred_check
      _
    $region23: #{tpu_custom_call.1} parent=1 // pred_check_branch
      %52 = sbr.rel (0) target = $region25
    $region24: #{tpu_custom_call.1} parent=1 // pred_region
      %53 = dma.done [#allocation6], 128
    $region25: #{tpu_custom_call.1} parent=1 // pred_fallthru
      _
    // Predicated region
    $region26: #{tpu_custom_call.1} parent=1 // pred_check
      _
    $region27: #{tpu_custom_call.1} parent=1 // pred_check_branch
      %55 = sbr.rel (0) target = $region29
    $region28: #{tpu_custom_call.1} parent=1 // pred_region
      %56 = dma.done [#allocation6], 5120
    $region29: #{tpu_custom_call.1} parent=1 // pred_fallthru
      _
    %v58 = vld [vmem:[%s3] sm:$0x1]
    %v59 = vld [vmem:[%s3 + $0x1] sm:$0x1]
    %v60 = vld [vmem:[%s3 + $0x2] sm:$0x1]
    %v61 = vld [vmem:[%s3 + $0x3] sm:$0x1]
    %v62 = vld [vmem:[%s3 + $0x4] sm:$0x1]
    %v63 = vld [vmem:[%s3 + $0x5] sm:$0x1]
    %v64 = vld [vmem:[%s3 + $0x6] sm:$0x1]
    %v65 = vld [vmem:[%s3 + $0x7] sm:$0x1]
    %v66 = vld [vmem:[#allocation2] sm:$0xff]
    %v67 = vpack.c.bf16 %v66, %v66
    %v68 = vld [vmem:[#allocation5] sm:$0xf]
    %v69 = vld [vmem:[#allocation5 + $0x4] sm:$0xf]
    %v70 = vlaneseq
    %v71 = vshrl.u32 %v70, 7
    %v72 = vsub.s32 0, %v71
    %v73 = vrot.slane %v58, %v72
    %v76 = vunpack.c.l.b16 %v68
    %v77 = vunpack.c.l.b16 %v69
    %v78 = vpack.c.b16 %v77, %v76
    %vm80 = vcmask 130048
    %v82 = vsel %vm80, %v67, 0
    %84 = vmatprep.subr.bf16.mxu0 0
    %85 = vmatpush1.bf16.msra.mxu0 %v78
    %86 = vmatprep.subr.bf16.mxu0 0
    %87 = vmatpush1.bf16.msra.mxu0 0
    %88 = vmatprep.subr.bf16.mxu0 0
    %89 = vmatpush1.bf16.msra.mxu0 0
    %90 = vmatprep.subr.bf16.mxu0 0
    %91 = vmatpush1.bf16.msra.mxu0 0
    %92 = vmatprep.subr.bf16.mxu0 0
    %93 = vmatpush1.bf16.msra.mxu0 0
    %94 = vmatprep.subr.bf16.mxu0 0
    %95 = vmatpush1.bf16.msra.mxu0 0
    %96 = vmatprep.subr.bf16.mxu0 0
    %97 = vmatpush1.bf16.msra.mxu0 0
    %98 = vmatprep.subr.bf16.mxu0 0
    %99 = vmatpush1.bf16.msra.mxu0 0
    %100 = vmatprep.subr.bf16.mxu0 0
    %101 = vmatpush1.bf16.msra.mxu0 0
    %102 = vmatprep.subr.bf16.mxu0 0
    %103 = vmatpush1.bf16.msra.mxu0 0
    %104 = vmatprep.subr.bf16.mxu0 0
    %105 = vmatpush1.bf16.msra.mxu0 0
    %106 = vmatprep.subr.bf16.mxu0 0
    %107 = vmatpush1.bf16.msra.mxu0 0
    %108 = vmatprep.subr.bf16.mxu0 0
    %109 = vmatpush1.bf16.msra.mxu0 0
    %110 = vmatprep.subr.bf16.mxu0 0
    %111 = vmatpush1.bf16.msra.mxu0 0
    %112 = vmatprep.subr.bf16.mxu0 0
    %113 = vmatpush1.bf16.msra.mxu0 0
    %114 = vmatprep.subr.bf16.mxu0 0
    %115 = vmatpush1.bf16.msra.mxu0 0
    %116 = vmatprep.mubr.bf16.mxu0 0
    %117 = vmatmul.mubr.bf16.gmra.mrb[0].mxu0 %v82
    %v118 = vpop.f32.mrb[0].mxu0
    %v119 = vadd.f32 %v73, %v118
    %v120 = vpop.f32.mrb[0].mxu0
    %v121 = vpop.f32.mrb[0].mxu0
    %v122 = vpop.f32.mrb[0].mxu0
    %123 = vdwg.mxu0
    %v124 = vmax.f32 %v119, 0.0
    %v125 = vld [vmem:[#allocation7] sm:$0xf]
    %v126 = vld [vmem:[#allocation7 + $0x4] sm:$0xf]
    %v127 = vld [vmem:[#allocation7 + $0x8] sm:$0xf]
    %v128 = vld [vmem:[#allocation7 + $0xc] sm:$0xf]
    %v129 = vld [vmem:[#allocation7 + $0x10] sm:$0xf]
    %v130 = vld [vmem:[#allocation7 + $0x14] sm:$0xf]
    %v131 = vld [vmem:[#allocation7 + $0x18] sm:$0xf]
    %v132 = vld [vmem:[#allocation7 + $0x1c] sm:$0xf]
    %v133 = vld [vmem:[#allocation7 + $0x20] sm:$0xf]
    %v134 = vld [vmem:[#allocation7 + $0x24] sm:$0xf]
    %v135 = vld [vmem:[#allocation7 + $0x28] sm:$0xf]
    %v136 = vld [vmem:[#allocation7 + $0x2c] sm:$0xf]
    %v137 = vld [vmem:[#allocation7 + $0x30] sm:$0xf]
    %v138 = vld [vmem:[#allocation7 + $0x34] sm:$0xf]
    %v139 = vld [vmem:[#allocation7 + $0x38] sm:$0xf]
    %v140 = vld [vmem:[#allocation7 + $0x3c] sm:$0xf]
    %s141 = scalar_lea.vmem [#allocation7], 64
    %v142 = vld [vmem:[%s141] sm:$0xf]
    %v143 = vld [vmem:[%s141 + $0x4] sm:$0xf]
    %v144 = vld [vmem:[%s141 + $0x8] sm:$0xf]
    %v145 = vld [vmem:[%s141 + $0xc] sm:$0xf]
    %v146 = vld [vmem:[%s141 + $0x10] sm:$0xf]
    %v147 = vld [vmem:[%s141 + $0x14] sm:$0xf]
    %v148 = vld [vmem:[%s141 + $0x18] sm:$0xf]
    %v149 = vld [vmem:[%s141 + $0x1c] sm:$0xf]
    %v150 = vld [vmem:[%s141 + $0x20] sm:$0xf]
    %v151 = vld [vmem:[%s141 + $0x24] sm:$0xf]
    %v152 = vld [vmem:[%s141 + $0x28] sm:$0xf]
    %v153 = vld [vmem:[%s141 + $0x2c] sm:$0xf]
    %v154 = vld [vmem:[%s141 + $0x30] sm:$0xf]
    %v155 = vld [vmem:[%s141 + $0x34] sm:$0xf]
    %v156 = vld [vmem:[%s141 + $0x38] sm:$0xf]
    %v157 = vld [vmem:[%s141 + $0x3c] sm:$0xf]
    %v158 = vpack.c.bf16 %v124, %v124
    %v159 = vlaneseq
    %v160 = vshrl.u32 %v159, 7
    %v161 = vsub.s32 0, %v160
    %v162 = vrot.slane %v59, %v161
    %v179 = vunpack.c.l.b16 %v125
    %v180 = vunpack.c.l.b16 %v126
    %v181 = vunpack.c.l.b16 %v127
    %v182 = vunpack.c.l.b16 %v128
    %v183 = vunpack.c.l.b16 %v129
    %v184 = vunpack.c.l.b16 %v130
    %v185 = vunpack.c.l.b16 %v131
    %v186 = vunpack.c.l.b16 %v132
    %v187 = vunpack.c.l.b16 %v133
    %v188 = vunpack.c.l.b16 %v134
    %v189 = vunpack.c.l.b16 %v135
    %v190 = vunpack.c.l.b16 %v136
    %v191 = vunpack.c.l.b16 %v137
    %v192 = vunpack.c.l.b16 %v138
    %v193 = vunpack.c.l.b16 %v139
    %v194 = vunpack.c.l.b16 %v140
    %v195 = vpack.c.b16 %v180, %v179
    %v196 = vpack.c.b16 %v182, %v181
    %v197 = vpack.c.b16 %v184, %v183
    %v198 = vpack.c.b16 %v186, %v185
    %v199 = vpack.c.b16 %v188, %v187
    %v200 = vpack.c.b16 %v190, %v189
    %v201 = vpack.c.b16 %v192, %v191
    %v202 = vpack.c.b16 %v194, %v193
    %211 = vmatprep.subr.bf16.mxu0 0
    %212 = vmatpush1.bf16.msra.mxu0 %v195
    %213 = vmatprep.subr.bf16.mxu0 0
    %214 = vmatpush1.bf16.msra.mxu0 %v196
    %215 = vmatprep.subr.bf16.mxu0 0
    %216 = vmatpush1.bf16.msra.mxu0 %v197
    %217 = vmatprep.subr.bf16.mxu0 0
    %218 = vmatpush1.bf16.msra.mxu0 %v198
    %219 = vmatprep.subr.bf16.mxu0 0
    %220 = vmatpush1.bf16.msra.mxu0 %v199
    %221 = vmatprep.subr.bf16.mxu0 0
    %222 = vmatpush1.bf16.msra.mxu0 %v200
    %223 = vmatprep.subr.bf16.mxu0 0
    %224 = vmatpush1.bf16.msra.mxu0 %v201
    %225 = vmatprep.subr.bf16.mxu0 0
    %226 = vmatpush1.bf16.msra.mxu0 %v202
    %227 = vmatprep.subr.bf16.mxu0 0
    %228 = vmatpush1.bf16.msra.mxu0 0
    %229 = vmatprep.subr.bf16.mxu0 0
    %230 = vmatpush1.bf16.msra.mxu0 0
    %231 = vmatprep.subr.bf16.mxu0 0
    %232 = vmatpush1.bf16.msra.mxu0 0
    %233 = vmatprep.subr.bf16.mxu0 0
    %234 = vmatpush1.bf16.msra.mxu0 0
    %235 = vmatprep.subr.bf16.mxu0 0
    %236 = vmatpush1.bf16.msra.mxu0 0
    %237 = vmatprep.subr.bf16.mxu0 0
    %238 = vmatpush1.bf16.msra.mxu0 0
    %239 = vmatprep.subr.bf16.mxu0 0
    %240 = vmatpush1.bf16.msra.mxu0 0
    %241 = vmatprep.subr.bf16.mxu0 0
    %242 = vmatpush1.bf16.msra.mxu0 0
    %243 = vmatprep.mubr.bf16.mxu0 0
    %244 = vmatmul.mubr.bf16.gmra.mrb[0].mxu0 %v158
    %v245 = vpop.f32.mrb[0].mxu0
    %v246 = vadd.f32 %v162, %v245
    %v247 = vpop.f32.mrb[0].mxu0
    %v248 = vpop.f32.mrb[0].mxu0
    %v249 = vpop.f32.mrb[0].mxu0
    %250 = vdwg.mxu0
    %v251 = vmax.f32 %v246, 0.0
    %v252 = vpack.c.bf16 %v251, %v251
    %v253 = vlaneseq
    %v254 = vshrl.u32 %v253, 7
    %v255 = vsub.s32 0, %v254
    %v256 = vrot.slane %v60, %v255
    %v273 = vunpack.c.l.b16 %v142
    %v274 = vunpack.c.l.b16 %v143
    %v275 = vunpack.c.l.b16 %v144
    %v276 = vunpack.c.l.b16 %v145
    %v277 = vunpack.c.l.b16 %v146
    %v278 = vunpack.c.l.b16 %v147
    %v279 = vunpack.c.l.b16 %v148
    %v280 = vunpack.c.l.b16 %v149
    %v281 = vunpack.c.l.b16 %v150
    %v282 = vunpack.c.l.b16 %v151
    %v283 = vunpack.c.l.b16 %v152
    %v284 = vunpack.c.l.b16 %v153
    %v285 = vunpack.c.l.b16 %v154
    %v286 = vunpack.c.l.b16 %v155
    %v287 = vunpack.c.l.b16 %v156
    %v288 = vunpack.c.l.b16 %v157
    %v289 = vpack.c.b16 %v274, %v273
    %v290 = vpack.c.b16 %v276, %v275
    %v291 = vpack.c.b16 %v278, %v277
    %v292 = vpack.c.b16 %v280, %v279
    %v293 = vpack.c.b16 %v282, %v281
    %v294 = vpack.c.b16 %v284, %v283
    %v295 = vpack.c.b16 %v286, %v285
    %v296 = vpack.c.b16 %v288, %v287
    %305 = vmatprep.subr.bf16.mxu0 0
    %306 = vmatpush1.bf16.msra.mxu0 %v289
    %307 = vmatprep.subr.bf16.mxu0 0
    %308 = vmatpush1.bf16.msra.mxu0 %v290
    %309 = vmatprep.subr.bf16.mxu0 0
    %310 = vmatpush1.bf16.msra.mxu0 %v291
    %311 = vmatprep.subr.bf16.mxu0 0
    %312 = vmatpush1.bf16.msra.mxu0 %v292
    %313 = vmatprep.subr.bf16.mxu0 0
    %314 = vmatpush1.bf16.msra.mxu0 %v293
    %315 = vmatprep.subr.bf16.mxu0 0
    %316 = vmatpush1.bf16.msra.mxu0 %v294
    %317 = vmatprep.subr.bf16.mxu0 0
    %318 = vmatpush1.bf16.msra.mxu0 %v295
    %319 = vmatprep.subr.bf16.mxu0 0
    %320 = vmatpush1.bf16.msra.mxu0 %v296
    %321 = vmatprep.subr.bf16.mxu0 0
    %322 = vmatpush1.bf16.msra.mxu0 0
    %323 = vmatprep.subr.bf16.mxu0 0
    %324 = vmatpush1.bf16.msra.mxu0 0
    %325 = vmatprep.subr.bf16.mxu0 0
    %326 = vmatpush1.bf16.msra.mxu0 0
    %327 = vmatprep.subr.bf16.mxu0 0
    %328 = vmatpush1.bf16.msra.mxu0 0
    %329 = vmatprep.subr.bf16.mxu0 0
    %330 = vmatpush1.bf16.msra.mxu0 0
    %331 = vmatprep.subr.bf16.mxu0 0
    %332 = vmatpush1.bf16.msra.mxu0 0
    %333 = vmatprep.subr.bf16.mxu0 0
    %334 = vmatpush1.bf16.msra.mxu0 0
    %335 = vmatprep.subr.bf16.mxu0 0
    %336 = vmatpush1.bf16.msra.mxu0 0
    %337 = vmatprep.mubr.bf16.mxu0 0
    %338 = vmatmul.mubr.bf16.gmra.mrb[0].mxu0 %v252
    %v339 = vpop.f32.mrb[0].mxu0
    %v340 = vadd.f32 %v256, %v339
    %v341 = vpop.f32.mrb[0].mxu0
    %v342 = vpop.f32.mrb[0].mxu0
    %v343 = vpop.f32.mrb[0].mxu0
    %344 = vdwg.mxu0
    %v345 = vmax.f32 %v340, 0.0
    %v346 = vadd.f32 %v124, %v345
    %v347 = vrot.slane %v346, 4
    %v348 = vadd.f32 %v346, %v347
    %v349 = vrot.slane %v348, 2
    %v350 = vadd.f32 %v348, %v349
    %v351 = vrot.slane %v350, 1
    %v352 = vadd.f32 %v350, %v351
    %v353 = vrcp.pop 8.0
    %v354 = vmul.f32 %v352, %v353
    %v355 = vmul.f32 %v346, %v346
    %v356 = vrot.slane %v355, 4
    %v357 = vadd.f32 %v355, %v356
    %v358 = vrot.slane %v357, 2
    %v359 = vadd.f32 %v357, %v358
    %v360 = vrot.slane %v359, 1
    %v361 = vadd.f32 %v359, %v360
    %v362 = vmul.f32 %v361, %v353
    %v363 = vmul.f32 %v354, %v354
    %v364 = vsub.f32 %v362, %v363
    %v365 = vmax.f32 %v364, 0.0
    %v366 = vsub.f32 %v346, %v354
    %v367 = vadd.f32 %v365, 1e-05
    %v368 = vrsqrt.pop %v367
    %v369 = vmul.f32 %v366, %v368
    %v370 = vlaneseq
    %v371 = vshrl.u32 %v370, 7
    %v372 = vsub.s32 0, %v371
    %v373 = vrot.slane %v61, %v372
    %v374 = vmul.f32 %v369, %v373
    %v375 = vlaneseq
    %v376 = vshrl.u32 %v375, 7
    %v377 = vsub.s32 0, %v376
    %v378 = vrot.slane %v62, %v377
    %v379 = vadd.f32 %v374, %v378
    %s380 = scalar_lea.vmem [#allocation7], 128
    %v381 = vld [vmem:[%s380] sm:$0xf]
    %v382 = vld [vmem:[%s380 + $0x4] sm:$0xf]
    %v383 = vld [vmem:[%s380 + $0x8] sm:$0xf]
    %v384 = vld [vmem:[%s380 + $0xc] sm:$0xf]
    %v385 = vld [vmem:[%s380 + $0x10] sm:$0xf]
    %v386 = vld [vmem:[%s380 + $0x14] sm:$0xf]
    %v387 = vld [vmem:[%s380 + $0x18] sm:$0xf]
    %v388 = vld [vmem:[%s380 + $0x1c] sm:$0xf]
    %v389 = vld [vmem:[%s380 + $0x20] sm:$0xf]
    %v390 = vld [vmem:[%s380 + $0x24] sm:$0xf]
    %v391 = vld [vmem:[%s380 + $0x28] sm:$0xf]
    %v392 = vld [vmem:[%s380 + $0x2c] sm:$0xf]
    %v393 = vld [vmem:[%s380 + $0x30] sm:$0xf]
    %v394 = vld [vmem:[%s380 + $0x34] sm:$0xf]
    %v395 = vld [vmem:[%s380 + $0x38] sm:$0xf]
    %v396 = vld [vmem:[%s380 + $0x3c] sm:$0xf]
    %s397 = scalar_lea.vmem [#allocation7], 192
    %v398 = vld [vmem:[%s397] sm:$0xf]
    %v399 = vld [vmem:[%s397 + $0x4] sm:$0xf]
    %v400 = vld [vmem:[%s397 + $0x8] sm:$0xf]
    %v401 = vld [vmem:[%s397 + $0xc] sm:$0xf]
    %v402 = vld [vmem:[%s397 + $0x10] sm:$0xf]
    %v403 = vld [vmem:[%s397 + $0x14] sm:$0xf]
    %v404 = vld [vmem:[%s397 + $0x18] sm:$0xf]
    %v405 = vld [vmem:[%s397 + $0x1c] sm:$0xf]
    %v406 = vld [vmem:[%s397 + $0x20] sm:$0xf]
    %v407 = vld [vmem:[%s397 + $0x24] sm:$0xf]
    %v408 = vld [vmem:[%s397 + $0x28] sm:$0xf]
    %v409 = vld [vmem:[%s397 + $0x2c] sm:$0xf]
    %v410 = vld [vmem:[%s397 + $0x30] sm:$0xf]
    %v411 = vld [vmem:[%s397 + $0x34] sm:$0xf]
    %v412 = vld [vmem:[%s397 + $0x38] sm:$0xf]
    %v413 = vld [vmem:[%s397 + $0x3c] sm:$0xf]
    %v414 = vpack.c.bf16 %v379, %v379
    %v415 = vlaneseq
    %v416 = vshrl.u32 %v415, 7
    %v417 = vsub.s32 0, %v416
    %v418 = vrot.slane %v63, %v417
    %v435 = vunpack.c.l.b16 %v381
    %v436 = vunpack.c.l.b16 %v382
    %v437 = vunpack.c.l.b16 %v383
    %v438 = vunpack.c.l.b16 %v384
    %v439 = vunpack.c.l.b16 %v385
    %v440 = vunpack.c.l.b16 %v386
    %v441 = vunpack.c.l.b16 %v387
    %v442 = vunpack.c.l.b16 %v388
    %v443 = vunpack.c.l.b16 %v389
    %v444 = vunpack.c.l.b16 %v390
    %v445 = vunpack.c.l.b16 %v391
    %v446 = vunpack.c.l.b16 %v392
    %v447 = vunpack.c.l.b16 %v393
    %v448 = vunpack.c.l.b16 %v394
    %v449 = vunpack.c.l.b16 %v395
    %v450 = vunpack.c.l.b16 %v396
    %v451 = vpack.c.b16 %v436, %v435
    %v452 = vpack.c.b16 %v438, %v437
    %v453 = vpack.c.b16 %v440, %v439
    %v454 = vpack.c.b16 %v442, %v441
    %v455 = vpack.c.b16 %v444, %v443
    %v456 = vpack.c.b16 %v446, %v445
    %v457 = vpack.c.b16 %v448, %v447
    %v458 = vpack.c.b16 %v450, %v449
    %467 = vmatprep.subr.bf16.mxu0 0
    %468 = vmatpush1.bf16.msra.mxu0 %v451
    %469 = vmatprep.subr.bf16.mxu0 0
    %470 = vmatpush1.bf16.msra.mxu0 %v452
    %471 = vmatprep.subr.bf16.mxu0 0
    %472 = vmatpush1.bf16.msra.mxu0 %v453
    %473 = vmatprep.subr.bf16.mxu0 0
    %474 = vmatpush1.bf16.msra.mxu0 %v454
    %475 = vmatprep.subr.bf16.mxu0 0
    %476 = vmatpush1.bf16.msra.mxu0 %v455
    %477 = vmatprep.subr.bf16.mxu0 0
    %478 = vmatpush1.bf16.msra.mxu0 %v456
    %479 = vmatprep.subr.bf16.mxu0 0
    %480 = vmatpush1.bf16.msra.mxu0 %v457
    %481 = vmatprep.subr.bf16.mxu0 0
    %482 = vmatpush1.bf16.msra.mxu0 %v458
    %483 = vmatprep.subr.bf16.mxu0 0
    %484 = vmatpush1.bf16.msra.mxu0 0
    %485 = vmatprep.subr.bf16.mxu0 0
    %486 = vmatpush1.bf16.msra.mxu0 0
    %487 = vmatprep.subr.bf16.mxu0 0
    %488 = vmatpush1.bf16.msra.mxu0 0
    %489 = vmatprep.subr.bf16.mxu0 0
    %490 = vmatpush1.bf16.msra.mxu0 0
    %491 = vmatprep.subr.bf16.mxu0 0
    %492 = vmatpush1.bf16.msra.mxu0 0
    %493 = vmatprep.subr.bf16.mxu0 0
    %494 = vmatpush1.bf16.msra.mxu0 0
    %495 = vmatprep.subr.bf16.mxu0 0
    %496 = vmatpush1.bf16.msra.mxu0 0
    %497 = vmatprep.subr.bf16.mxu0 0
    %498 = vmatpush1.bf16.msra.mxu0 0
    %499 = vmatprep.mubr.bf16.mxu0 0
    %500 = vmatmul.mubr.bf16.gmra.mrb[0].mxu0 %v414
    %v501 = vpop.f32.mrb[0].mxu0
    %v502 = vadd.f32 %v418, %v501
    %v503 = vpop.f32.mrb[0].mxu0
    %v504 = vpop.f32.mrb[0].mxu0
    %v505 = vpop.f32.mrb[0].mxu0
    %506 = vdwg.mxu0
    %v507 = vmax.f32 %v502, 0.0
    %v508 = vpack.c.bf16 %v507, %v507
    %v509 = vlaneseq
    %v510 = vshrl.u32 %v509, 7
    %v511 = vsub.s32 0, %v510
    %v512 = vrot.slane %v64, %v511
    %v529 = vunpack.c.l.b16 %v398
    %v530 = vunpack.c.l.b16 %v399
    %v531 = vunpack.c.l.b16 %v400
    %v532 = vunpack.c.l.b16 %v401
    %v533 = vunpack.c.l.b16 %v402
    %v534 = vunpack.c.l.b16 %v403
    %v535 = vunpack.c.l.b16 %v404
    %v536 = vunpack.c.l.b16 %v405
    %v537 = vunpack.c.l.b16 %v406
    %v538 = vunpack.c.l.b16 %v407
    %v539 = vunpack.c.l.b16 %v408
    %v540 = vunpack.c.l.b16 %v409
    %v541 = vunpack.c.l.b16 %v410
    %v542 = vunpack.c.l.b16 %v411
    %v543 = vunpack.c.l.b16 %v412
    %v544 = vunpack.c.l.b16 %v413
    %v545 = vpack.c.b16 %v530, %v529
    %v546 = vpack.c.b16 %v532, %v531
    %v547 = vpack.c.b16 %v534, %v533
    %v548 = vpack.c.b16 %v536, %v535
    %v549 = vpack.c.b16 %v538, %v537
    %v550 = vpack.c.b16 %v540, %v539
    %v551 = vpack.c.b16 %v542, %v541
    %v552 = vpack.c.b16 %v544, %v543
    %561 = vmatprep.subr.bf16.mxu0 0
    %562 = vmatpush1.bf16.msra.mxu0 %v545
    %563 = vmatprep.subr.bf16.mxu0 0
    %564 = vmatpush1.bf16.msra.mxu0 %v546
    %565 = vmatprep.subr.bf16.mxu0 0
    %566 = vmatpush1.bf16.msra.mxu0 %v547
    %567 = vmatprep.subr.bf16.mxu0 0
    %568 = vmatpush1.bf16.msra.mxu0 %v548
    %569 = vmatprep.subr.bf16.mxu0 0
    %570 = vmatpush1.bf16.msra.mxu0 %v549
    %571 = vmatprep.subr.bf16.mxu0 0
    %572 = vmatpush1.bf16.msra.mxu0 %v550
    %573 = vmatprep.subr.bf16.mxu0 0
    %574 = vmatpush1.bf16.msra.mxu0 %v551
    %575 = vmatprep.subr.bf16.mxu0 0
    %576 = vmatpush1.bf16.msra.mxu0 %v552
    %577 = vmatprep.subr.bf16.mxu0 0
    %578 = vmatpush1.bf16.msra.mxu0 0
    %579 = vmatprep.subr.bf16.mxu0 0
    %580 = vmatpush1.bf16.msra.mxu0 0
    %581 = vmatprep.subr.bf16.mxu0 0
    %582 = vmatpush1.bf16.msra.mxu0 0
    %583 = vmatprep.subr.bf16.mxu0 0
    %584 = vmatpush1.bf16.msra.mxu0 0
    %585 = vmatprep.subr.bf16.mxu0 0
    %586 = vmatpush1.bf16.msra.mxu0 0
    %587 = vmatprep.subr.bf16.mxu0 0
    %588 = vmatpush1.bf16.msra.mxu0 0
    %589 = vmatprep.subr.bf16.mxu0 0
    %590 = vmatpush1.bf16.msra.mxu0 0
    %591 = vmatprep.subr.bf16.mxu0 0
    %592 = vmatpush1.bf16.msra.mxu0 0
    %593 = vmatprep.mubr.bf16.mxu0 0
    %594 = vmatmul.mubr.bf16.gmra.mrb[0].mxu0 %v508
    %v595 = vpop.f32.mrb[0].mxu0
    %v596 = vadd.f32 %v512, %v595
    %v597 = vpop.f32.mrb[0].mxu0
    %v598 = vpop.f32.mrb[0].mxu0
    %v599 = vpop.f32.mrb[0].mxu0
    %600 = vdwg.mxu0
    %v601 = vmax.f32 %v596, 0.0
    %v602 = vadd.f32 %v379, %v601
    %v603 = vrot.slane %v602, 4
    %v604 = vadd.f32 %v602, %v603
    %v605 = vrot.slane %v604, 2
    %v606 = vadd.f32 %v604, %v605
    %v607 = vrot.slane %v606, 1
    %v608 = vadd.f32 %v606, %v607
    %v609 = vmul.f32 %v608, %v353
    %v610 = vmul.f32 %v602, %v602
    %v611 = vrot.slane %v610, 4
    %v612 = vadd.f32 %v610, %v611
    %v613 = vrot.slane %v612, 2
    %v614 = vadd.f32 %v612, %v613
    %v615 = vrot.slane %v614, 1
    %v616 = vadd.f32 %v614, %v615
    %v617 = vmul.f32 %v616, %v353
    %v618 = vmul.f32 %v609, %v609
    %v619 = vsub.f32 %v617, %v618
    %v620 = vmax.f32 %v619, 0.0
    %v621 = vsub.f32 %v602, %v609
    %v622 = vadd.f32 %v620, 1e-05
    %v623 = vrsqrt.pop %v622
    %v624 = vmul.f32 %v621, %v623
    %v625 = vpack.c.bf16 %v624, %v624
    %s626 = scalar_lea.vmem [#allocation7], 256
    %v627 = vld [vmem:[%s626] sm:$0xf]
    %v628 = vld [vmem:[%s626 + $0x4] sm:$0xf]
    %v629 = vld [vmem:[%s626 + $0x8] sm:$0xf]
    %v630 = vld [vmem:[%s626 + $0xc] sm:$0xf]
    %v631 = vld [vmem:[%s626 + $0x10] sm:$0xf]
    %v632 = vld [vmem:[%s626 + $0x14] sm:$0xf]
    %v633 = vld [vmem:[%s626 + $0x18] sm:$0xf]
    %v634 = vld [vmem:[%s626 + $0x1c] sm:$0xf]
    %v635 = vld [vmem:[%s626 + $0x20] sm:$0xf]
    %v636 = vld [vmem:[%s626 + $0x24] sm:$0xf]
    %v637 = vld [vmem:[%s626 + $0x28] sm:$0xf]
    %v638 = vld [vmem:[%s626 + $0x2c] sm:$0xf]
    %v639 = vld [vmem:[%s626 + $0x30] sm:$0xf]
    %v640 = vld [vmem:[%s626 + $0x34] sm:$0xf]
    %v641 = vld [vmem:[%s626 + $0x38] sm:$0xf]
    %v642 = vld [vmem:[%s626 + $0x3c] sm:$0xf]
    %v643 = vlaneseq
    %v644 = vshrl.u32 %v643, 7
    %v645 = vsub.s32 0, %v644
    %v646 = vrot.slane %v65, %v645
    %v663 = vunpack.c.l.b16 %v627
    %v664 = vunpack.c.l.b16 %v628
    %v665 = vunpack.c.l.b16 %v629
    %v666 = vunpack.c.l.b16 %v630
    %v667 = vunpack.c.l.b16 %v631
    %v668 = vunpack.c.l.b16 %v632
    %v669 = vunpack.c.l.b16 %v633
    %v670 = vunpack.c.l.b16 %v634
    %v671 = vunpack.c.l.b16 %v635
    %v672 = vunpack.c.l.b16 %v636
    %v673 = vunpack.c.l.b16 %v637
    %v674 = vunpack.c.l.b16 %v638
    %v675 = vunpack.c.l.b16 %v639
    %v676 = vunpack.c.l.b16 %v640
    %v677 = vunpack.c.l.b16 %v641
    %v678 = vunpack.c.l.b16 %v642
    %v679 = vpack.c.b16 %v664, %v663
    %v680 = vpack.c.b16 %v666, %v665
    %v681 = vpack.c.b16 %v668, %v667
    %v682 = vpack.c.b16 %v670, %v669
    %v683 = vpack.c.b16 %v672, %v671
    %v684 = vpack.c.b16 %v674, %v673
    %v685 = vpack.c.b16 %v676, %v675
    %v686 = vpack.c.b16 %v678, %v677
    %695 = vmatprep.subr.bf16.mxu0 0
    %696 = vmatpush1.bf16.msra.mxu0 %v679
    %697 = vmatprep.subr.bf16.mxu0 0
    %698 = vmatpush1.bf16.msra.mxu0 %v680
    %699 = vmatprep.subr.bf16.mxu0 0
    %700 = vmatpush1.bf16.msra.mxu0 %v681
    %701 = vmatprep.subr.bf16.mxu0 0
    %702 = vmatpush1.bf16.msra.mxu0 %v682
    %703 = vmatprep.subr.bf16.mxu0 0
    %704 = vmatpush1.bf16.msra.mxu0 %v683
    %705 = vmatprep.subr.bf16.mxu0 0
    %706 = vmatpush1.bf16.msra.mxu0 %v684
    %707 = vmatprep.subr.bf16.mxu0 0
    %708 = vmatpush1.bf16.msra.mxu0 %v685
    %709 = vmatprep.subr.bf16.mxu0 0
    %710 = vmatpush1.bf16.msra.mxu0 %v686
    %711 = vmatprep.subr.bf16.mxu0 0
    %712 = vmatpush1.bf16.msra.mxu0 0
    %713 = vmatprep.subr.bf16.mxu0 0
    %714 = vmatpush1.bf16.msra.mxu0 0
    %715 = vmatprep.subr.bf16.mxu0 0
    %716 = vmatpush1.bf16.msra.mxu0 0
    %717 = vmatprep.subr.bf16.mxu0 0
    %718 = vmatpush1.bf16.msra.mxu0 0
    %719 = vmatprep.subr.bf16.mxu0 0
    %720 = vmatpush1.bf16.msra.mxu0 0
    %721 = vmatprep.subr.bf16.mxu0 0
    %722 = vmatpush1.bf16.msra.mxu0 0
    %723 = vmatprep.subr.bf16.mxu0 0
    %724 = vmatpush1.bf16.msra.mxu0 0
    %725 = vmatprep.subr.bf16.mxu0 0
    %726 = vmatpush1.bf16.msra.mxu0 0
    %727 = vmatprep.mubr.bf16.mxu0 0
    %728 = vmatmul.mubr.bf16.gmra.mrb[0].mxu0 %v625
    %v729 = vpop.f32.mrb[0].mxu0
    %v730 = vadd.f32 %v646, %v729
    %v731 = vpop.f32.mrb[0].mxu0
    %v732 = vpop.f32.mrb[0].mxu0
    %v733 = vpop.f32.mrb[0].mxu0
    %734 = vdwg.mxu0
    %735 = vst [vmem:[#allocation8] sm:$0xff] %v730
    // Predicated region
    $region30: #{tpu_custom_call.1} parent=1 // pred_check
      _
    $region31: #{tpu_custom_call.1} parent=1 // pred_check_branch
      %737 = sbr.rel (0) target = $region33
    $region32: #{tpu_custom_call.1} parent=1 // pred_region
      %s739 = ssub.s32 128, 128
      %740 = vsyncadd [#allocation4], %s739
      %s742 = sshll.u32 [#allocation8], 4
      %s743 = int_to_ptr.vmem [resolvable:$true] %s742
      %745 = dma.vmem_to_hbm [thread:$0]  %s743, 128, %s4, [#allocation4]
    $region33: #{tpu_custom_call.1} parent=1 // pred_fallthru
      _
    // Predicated region
    $region34: #{tpu_custom_call.1} parent=1 // pred_check
      _
    $region35: #{tpu_custom_call.1} parent=1 // pred_check_branch
      %747 = sbr.rel (0) target = $region37
    $region36: #{tpu_custom_call.1} parent=1 // pred_region
      %748 = dma.done [#allocation4], 128
    $region37: #{tpu_custom_call.1} parent=1 // pred_fallthru
      _
    %749 = vsyncpa [#allocation3], 1
    %750 = vsyncpa [#allocation6], 1
    %751 = vsyncpa [#allocation4], 1

</llo_original>
